<compile_context>
chip_gen: v5e
topology: v5e:2x2
jax: 0.10.0
libtpu: 0.0.40
codegen_flags: <defaults>
</compile_context>

<pallas_src>
import functools

import jax
import jax.numpy as jnp
from jax import lax
from jax.experimental import pallas as pl
from jax.experimental.pallas import tpu as pltpu

EPS_NORM = 2.220446049250313e-16  # sys.float_info.epsilon, matching the PyTorch ref.
# NOTE: eps is below f32 resolution of typical norms, but a zero-norm column gives
# 0 * (1/eps) == 0 (finite), identical to the reference's torch.div(0, eps) in f32.


# ----------------------------------------------------------------------------
# Plain-JAX glue (feature pyramid + residual blocks), NHWC (TPU-native convs).
# ----------------------------------------------------------------------------
def reflection_pad(x, p):
    return jnp.pad(x, ((0, 0), (p, p), (p, p), (0, 0)), mode="reflect")


def conv2d(x, w, b, stride=1):
    # x: NHWC, w: OIHW (PyTorch weight layout kept for the params).
    out = lax.conv_general_dilated(
        x, w, window_strides=(stride, stride), padding="VALID",
        dimension_numbers=("NHWC", "OIHW", "NHWC"))
    return out + b[None, None, None, :]


def instance_norm(x, eps=1e-5):
    mean = jnp.mean(x, axis=(1, 2), keepdims=True)
    var = jnp.mean(jnp.square(x - mean), axis=(1, 2), keepdims=True)
    return (x - mean) * lax.rsqrt(var + eps)


def prelu(x, a):
    return jnp.where(x >= 0, x, a * x)


def upsample_nearest_nhwc(x, s):
    return jnp.repeat(jnp.repeat(x, s, axis=1), s, axis=2)


def upsample_nearest_nchw(x, s):
    return jnp.repeat(jnp.repeat(x, s, axis=2), s, axis=3)


def avg_pool_nhwc(x, k):
    B, H, W, C = x.shape
    return x.reshape(B, H // k, k, W // k, k, C).mean(axis=(2, 4))


def conv_block(x, w, b, a, stride=1):
    # ReflectionPad2d(1) -> Conv2d(3x3, pad=0) -> InstanceNorm2d -> PReLU
    x = reflection_pad(x, 1)
    x = conv2d(x, w, b, stride)
    x = instance_norm(x)
    return prelu(x, a)


def layer2_1(p, x):
    x = conv_block(x, p["c1_w"], p["c1_b"], p["a1"], 1)
    x = conv_block(x, p["c2_w"], p["c2_b"], p["a2"], 2)
    return x


def layer3_1(p, x):
    x = conv_block(x, p["c1_w"], p["c1_b"], p["a1"], 1)
    x = conv_block(x, p["c2_w"], p["c2_b"], p["a2"], 1)
    return x


def layer4_1(p, x):
    x = conv_block(x, p["c1_w"], p["c1_b"], p["a1"], 1)
    x = conv_block(x, p["c2_w"], p["c2_b"], p["a2"], 1)
    return upsample_nearest_nhwc(x, 2)


def layer5_1(p, x):
    x = conv_block(x, p["c1_w"], p["c1_b"], p["a1"], 1)
    x = upsample_nearest_nhwc(x, 2)
    x = conv_block(x, p["c2_w"], p["c2_b"], p["a2"], 1)
    return upsample_nearest_nhwc(x, 2)


def residual_block(p, x):
    residual = x
    out = reflection_pad(x, 1)
    out = conv2d(out, p["c1_w"], p["c1_b"], 1)
    out = instance_norm(out)
    out = prelu(out, p["a"])
    out = reflection_pad(out, 1)
    out = conv2d(out, p["c2_w"], p["c2_b"], 1)
    out = instance_norm(out)
    out = out + residual
    return prelu(out, p["a"])


# ----------------------------------------------------------------------------
# Hoisted projection (plain XLA): 1x1 conv, spatial centering, channel L2-norm.
# `scale` folds 1/temperature into theta (phi uses scale=1).  The conv bias is
# intentionally omitted: the spatial-mean centering cancels a per-channel
# constant exactly.
# ----------------------------------------------------------------------------
def project_features(feat_nc, w, scale):
    # feat_nc: (B, N, Cin) f32 (straight NHWC flatten, no relayout); w: (Ci, Cin).
    t = jnp.einsum("bnc,oc->bon", feat_nc, w)               # (B, Ci, N)
    t = t - jnp.mean(t, axis=-1, keepdims=True)             # center over spatial
    norm = jnp.sqrt(jnp.sum(t * t, axis=1, keepdims=True)) + EPS_NORM
    return (t * (scale / norm)).astype(jnp.bfloat16)


# ----------------------------------------------------------------------------
# Pallas kernel: fused non-local correlation attention, flash-style.
# Grid: (batch, query-row blocks, key blocks).  Per key block:
#   fT = phi_k^T-contraction with theta_q  (MXU, bf16 -> f32),
#   online-softmax update of the running max and of the stacked
#   [numerator; denominator] accumulator via one MXU dot against [lab; ones].
# At the last key block the (Cl+1, tq) output slab (y rows + sim row) is
# written lane-dense.
# ----------------------------------------------------------------------------
def _corr_kernel(theta_ref, phi_ref, lab_ref, out_ref, acc_ref, m_ref,
                 *, temperature, n_lab):
    k = pl.program_id(2)

    @pl.when(k == 0)
    def _():
        m_ref[...] = jnp.full_like(m_ref, -jnp.inf)
        acc_ref[...] = jnp.zeros_like(acc_ref)

    # f^T chunk: fT[key j, query i] = sum_c phi[c, j] * theta[c, i].
    # theta is pre-scaled by 1/temperature, so this is f / T directly.
    fT = lax.dot_general(
        phi_ref[0], theta_ref[0],
        dimension_numbers=(((0,), (0,)), ((), ())),
        preferred_element_type=jnp.float32)                  # (kb, tq) f32

    m_prev = m_ref[...]                                      # (1, tq)
    m_new = jnp.maximum(m_prev, jnp.max(fT, axis=0, keepdims=True))
    alpha = jnp.exp(m_prev - m_new)                          # (1, tq)
    e = jnp.exp(fT - m_new)                                  # (kb, tq)

    # Numerators for every lab channel + the softmax denominator in ONE MXU dot:
    # lab_ref holds [B_lab; ones] stacked to (Cl+1, kb).
    part = jnp.dot(lab_ref[0], e, preferred_element_type=jnp.float32)  # (Cl+1, tq)
    acc_ref[...] = alpha * acc_ref[...] + part
    m_ref[...] = m_new

    @pl.when(k == pl.num_programs(2) - 1)
    def _():
        acc = acc_ref[...]
        inv_l = pl.reciprocal(acc[n_lab:n_lab + 1, :], approx=True)    # EUP slot
        y_rows = acc[:n_lab, :] * inv_l                                # (Cl, tq)
        sim_row = m_ref[...] * temperature                             # undo 1/T fold
        out_ref[0] = jnp.concatenate([y_rows, sim_row], axis=0)        # (Cl+1, tq)


def _choose_tiles(N):
    # Query tile tq and key chunk kb.  Block last-dims must be divisible by 128
    # or equal the full extent.  tq=256 fills an MXU pass on all generations;
    # kb=512 keeps the per-step fT/e temporaries at ~0.5-1 MiB.
    if N % 128 != 0:
        return N, N
    tq = 256 if N % 256 == 0 else 128
    kb = 512 if N % 512 == 0 else (256 if N % 256 == 0 else 128)
    return tq, kb


def _physical_vmem_bytes():
    try:
        return int(pltpu.get_tpu_info().vmem_capacity_bytes)
    except Exception:
        return 64 * 1024 * 1024  # conservative default (v7x per-TC VMEM)


def corr_attention(theta, phi, lab_aug, temperature):
    # theta/phi: (B, Ci, N) bf16, centered + L2-normalized over Ci;
    #            theta is additionally pre-scaled by 1/temperature.
    # lab_aug:   (B, Cl+1, N) f32 with a trailing all-ones row.
    B, Ci, N = theta.shape
    Cl1 = lab_aug.shape[1]
    Cl = Cl1 - 1
    tq, kb = _choose_tiles(N)
    qb, kbs = N // tq, N // kb

    kernel = functools.partial(_corr_kernel,
                               temperature=float(temperature), n_lab=Cl)

    grid_spec = pltpu.PrefetchScalarGridSpec(
        num_scalar_prefetch=0,
        grid=(B, qb, kbs),
        in_specs=[
            pl.BlockSpec((1, Ci, tq), lambda b, q, k: (b, 0, q)),    # theta (queries)
            pl.BlockSpec((1, Ci, kb), lambda b, q, k: (b, 0, k)),    # phi (keys)
            pl.BlockSpec((1, Cl1, kb), lambda b, q, k: (b, 0, k)),   # [lab; ones]
        ],
        out_specs=pl.BlockSpec((1, Cl1, tq), lambda b, q, k: (b, 0, q)),
        scratch_shapes=[
            pltpu.VMEM((Cl1, tq), jnp.float32),   # running [numerators; denom]
            pltpu.VMEM((1, tq), jnp.float32),     # running max of f/T
        ],
    )

    # Per-step VMEM residency: double-buffered input/output blocks + f32
    # fT/e temporaries + scratch.  With the chunked design this stays small,
    # so the limit is only raised when the estimate is large, capped at 0.7x
    # physical VMEM (v7x has 64 MiB per TC).
    est_vmem = (2 * Ci * tq * 2 + 2 * Ci * kb * 2 + 2 * Cl1 * kb * 4
                + 2 * Cl1 * tq * 4 + (Cl1 + 1) * tq * 4 + 2 * kb * tq * 4)
    cparams = dict(dimension_semantics=("parallel", "parallel", "arbitrary"))
    if est_vmem > 12 * 1024 * 1024:
        cparams["vmem_limit_bytes"] = min(int(est_vmem * 1.5),
                                          int(0.7 * _physical_vmem_bytes()))

    out = pl.pallas_call(
        kernel,
        out_shape=jax.ShapeDtypeStruct((B, Cl1, N), jnp.float32),
        grid_spec=grid_spec,
        compiler_params=pltpu.CompilerParams(**cparams),
    )(theta, phi, lab_aug)
    return out[:, :Cl, :], out[:, Cl:, :]


# ----------------------------------------------------------------------------
# WarpNet forward
# ----------------------------------------------------------------------------
def warpnet_forward(params, B_lab_map,
                    A_relu2_1, A_relu3_1, A_relu4_1, A_relu5_1,
                    B_relu2_1, B_relu3_1, B_relu4_1, B_relu5_1,
                    temperature=0.001 * 5):
    temperature = float(temperature)
    assert temperature > 0.0, "softmax stabilization / 1/T fold requires temperature > 0"

    batch, channel, H, W = B_lab_map.shape
    fh, fw = H // 4, W // 4
    N = fh * fw

    def to_nhwc(x):
        return jnp.transpose(x, (0, 2, 3, 1))

    A2 = layer2_1(params["layer2_1"], to_nhwc(A_relu2_1))
    B2 = layer2_1(params["layer2_1"], to_nhwc(B_relu2_1))
    A3 = layer3_1(params["layer3_1"], to_nhwc(A_relu3_1))
    B3 = layer3_1(params["layer3_1"], to_nhwc(B_relu3_1))
    A4 = layer4_1(params["layer4_1"], to_nhwc(A_relu4_1))
    B4 = layer4_1(params["layer4_1"], to_nhwc(B_relu4_1))
    A5 = layer5_1(params["layer5_1"], to_nhwc(A_relu5_1))
    B5 = layer5_1(params["layer5_1"], to_nhwc(B_relu5_1))

    if A5.shape[1] != A2.shape[1] or A5.shape[2] != A2.shape[2]:
        # F.pad(x, (0, 0, 1, 1), 'replicate') -> pad height by 1 on both sides
        A5 = jnp.pad(A5, ((0, 0), (1, 1), (0, 0), (0, 0)), mode="edge")
        B5 = jnp.pad(B5, ((0, 0), (1, 1), (0, 0), (0, 0)), mode="edge")

    A_feat = jnp.concatenate([A2, A3, A4, A5], axis=3)
    B_feat = jnp.concatenate([B2, B3, B4, B5], axis=3)
    for rp in params["res_blocks"]:
        A_feat = residual_block(rp, A_feat)
        B_feat = residual_block(rp, B_feat)

    Cin = A_feat.shape[3]
    # Flatten NHWC directly to (B, N, Cin): no channel-major HBM relayout; the
    # projection contracts Cin as the last axis of both operands.
    A_flat = A_feat.reshape(batch, N, Cin)
    B_flat = B_feat.reshape(batch, N, Cin)

    # Hoisted projections (bf16); 1/temperature folded into theta.
    theta = project_features(A_flat, params["theta_w"], 1.0 / temperature)
    phi = project_features(B_flat, params["phi_w"], 1.0)

    # avg_pool + flatten: NHWC reshape gives (B, N, channel) with n = h*fw + w.
    B_lab = avg_pool_nhwc(to_nhwc(B_lab_map), 4).reshape(batch, N, channel)
    lab_aug = jnp.concatenate(
        [jnp.transpose(B_lab, (0, 2, 1)),
         jnp.ones((batch, 1, N), jnp.float32)], axis=1)        # (B, Cl+1, N)

    y_flat, sim_flat = corr_attention(theta, phi, lab_aug, temperature)

    y = y_flat.reshape(batch, channel, fh, fw)                 # already channel-major
    sim = sim_flat.reshape(batch, 1, fh, fw)
    y = upsample_nearest_nchw(y, 4)
    sim = upsample_nearest_nchw(sim, 4)
    return y, sim


# ----------------------------------------------------------------------------
# Deterministic parameter init (shapes from WarpNet.__init__)
# ----------------------------------------------------------------------------
def _conv_params(key, out_c, in_c, k):
    kw, kb = jax.random.split(key)
    w = jax.random.normal(kw, (out_c, in_c, k, k), jnp.float32) * 0.05
    b = jax.random.normal(kb, (out_c,), jnp.float32) * 0.01
    return w, b


def init_params(key):
    fc = 64
    keys = iter(jax.random.split(key, 32))

    def cp(out_c, in_c, k=3):
        return _conv_params(next(keys), out_c, in_c, k)

    def two_conv_layer(c1_out, c1_in, c2_out, c2_in):
        w1, b1 = cp(c1_out, c1_in)
        w2, b2 = cp(c2_out, c2_in)
        return dict(c1_w=w1, c1_b=b1, a1=jnp.float32(0.25),
                    c2_w=w2, c2_b=b2, a2=jnp.float32(0.25))

    params = {
        "layer2_1": two_conv_layer(128, 128, fc, 128),
        "layer3_1": two_conv_layer(128, 256, fc, 128),
        "layer4_1": two_conv_layer(256, 512, fc, 256),
        "layer5_1": two_conv_layer(256, 512, fc, 256),
    }

    res_blocks = []
    for _ in range(3):
        w1, b1 = cp(4 * fc, 4 * fc)
        w2, b2 = cp(4 * fc, 4 * fc)
        res_blocks.append(dict(c1_w=w1, c1_b=b1, c2_w=w2, c2_b=b2,
                               a=jnp.float32(0.25)))
    params["res_blocks"] = res_blocks

    # theta/phi 1x1 projections. Biases are intentionally not created: the
    # spatial-mean centering cancels a per-channel constant bias exactly.
    tw, _ = _conv_params(next(keys), 256, 4 * fc, 1)
    params["theta_w"] = tw.reshape(256, 4 * fc)
    pw, _ = _conv_params(next(keys), 256, 4 * fc, 1)
    params["phi_w"] = pw.reshape(256, 4 * fc)
    return params


# ----------------------------------------------------------------------------
if __name__ == "__main__":
    key = jax.random.PRNGKey(0)
    ks = jax.random.split(key, 16)

    batch, H, W = 2, 32, 32  # feature grid is 8x8 -> N = 64
    params = init_params(ks[0])

    B_lab_map = jax.random.uniform(ks[1], (batch, 1, H, W), jnp.float32) * 255.0
    # VGG-style relu features (non-negative), NCHW like the PyTorch module.
    A_r2 = jax.nn.relu(jax.random.normal(ks[2], (batch, 128, H // 2, W // 2), jnp.float32))
    A_r3 = jax.nn.relu(jax.random.normal(ks[3], (batch, 256, H // 4, W // 4), jnp.float32))
    A_r4 = jax.nn.relu(jax.random.normal(ks[4], (batch, 512, H // 8, W // 8), jnp.float32))
    A_r5 = jax.nn.relu(jax.random.normal(ks[5], (batch, 512, H // 16, W // 16), jnp.float32))
    B_r2 = jax.nn.relu(jax.random.normal(ks[6], (batch, 128, H // 2, W // 2), jnp.float32))
    B_r3 = jax.nn.relu(jax.random.normal(ks[7], (batch, 256, H // 4, W // 4), jnp.float32))
    B_r4 = jax.nn.relu(jax.random.normal(ks[8], (batch, 512, H // 8, W // 8), jnp.float32))
    B_r5 = jax.nn.relu(jax.random.normal(ks[9], (batch, 512, H // 16, W // 16), jnp.float32))

    fwd = jax.jit(warpnet_forward)
    y, sim = fwd(params, B_lab_map, A_r2, A_r3, A_r4, A_r5,
                 B_r2, B_r3, B_r4, B_r5)
    jax.block_until_ready((y, sim))

    assert y.shape == (batch, 1, H, W), y.shape
    assert sim.shape == (batch, 1, H, W), sim.shape
    assert jnp.all(jnp.isfinite(y)) and jnp.all(jnp.isfinite(sim))
    print("KERNEL_OK")
</pallas_src>

<mosaic_0001>
module attributes {stable_mosaic.version = 11 : i64} {
  func.func @_corr_kernel(%arg0: i32, %arg1: i32, %arg2: i32, %arg3: memref<1x256x64xbf16, #tpu.memory_space<vmem>>, %arg4: memref<1x256x64xbf16, #tpu.memory_space<vmem>>, %arg5: memref<1x2x64xf32, #tpu.memory_space<vmem>>, %arg6: memref<1x2x64xf32, #tpu.memory_space<vmem>>, %arg7: memref<2x64xf32, #tpu.memory_space<vmem>>, %arg8: memref<1x64xf32, #tpu.memory_space<vmem>>) attributes {dimension_semantics = [#tpu.dimension_semantics<parallel>, #tpu.dimension_semantics<parallel>, #tpu.dimension_semantics<arbitrary>], iteration_bounds = array<i64: 2, 1, 1>, scalar_prefetch = 0 : i64, scratch_operands = 2 : i64, tpu.core_type = #tpu.core_type<tc>, window_params = [{transform_indices = @transform_0, window_bounds = array<i64: 1, 256, 64>}, {transform_indices = @transform_1, window_bounds = array<i64: 1, 256, 64>}, {transform_indices = @transform_2, window_bounds = array<i64: 1, 2, 64>}, {transform_indices = @transform_3, window_bounds = array<i64: 1, 2, 64>}]} {
    %c0_i32 = arith.constant 0 : i32
    %0 = arith.cmpi eq, %arg2, %c0_i32 : i32
    %1 = arith.extui %0 : i1 to i32
    %c0_i32_0 = arith.constant 0 : i32
    %2 = arith.cmpi ne, %1, %c0_i32_0 : i32
    scf.if %2 {
      %cst_21 = arith.constant 0xFF800000 : f32
      %29 = vector.broadcast %cst_21 : f32 to vector<1x64xf32>
      %c0_22 = arith.constant 0 : index
      %c0_23 = arith.constant 0 : index
      %30 = vector.load %arg8[%c0_22, %c0_23] : memref<1x64xf32, #tpu.memory_space<vmem>>, vector<1x64xf32>
      tpu.vector_store %arg8[%c0_22, %c0_23], %29 {strides = array<i32>} : memref<1x64xf32, #tpu.memory_space<vmem>>, vector<1x64xf32>,
      %cst_24 = arith.constant 0.000000e+00 : f32
      %31 = vector.broadcast %cst_24 : f32 to vector<2x64xf32>
      %c0_25 = arith.constant 0 : index
      %c0_26 = arith.constant 0 : index
      %32 = vector.load %arg7[%c0_25, %c0_26] : memref<2x64xf32, #tpu.memory_space<vmem>>, vector<2x64xf32>
      tpu.vector_store %arg7[%c0_25, %c0_26], %31 {strides = array<i32>} : memref<2x64xf32, #tpu.memory_space<vmem>>, vector<2x64xf32>,
    } else {
    }
    %c0 = arith.constant 0 : index
    %c0_1 = arith.constant 0 : index
    %c0_2 = arith.constant 0 : index
    %3 = vector.load %arg4[%c0, %c0_1, %c0_2] : memref<1x256x64xbf16, #tpu.memory_space<vmem>>, vector<1x256x64xbf16>
    %4 = vector.shape_cast %3 : vector<1x256x64xbf16> to vector<256x64xbf16>
    %c0_3 = arith.constant 0 : index
    %c0_4 = arith.constant 0 : index
    %c0_5 = arith.constant 0 : index
    %5 = vector.load %arg3[%c0_3, %c0_4, %c0_5] : memref<1x256x64xbf16, #tpu.memory_space<vmem>>, vector<1x256x64xbf16>
    %6 = vector.shape_cast %5 : vector<1x256x64xbf16> to vector<256x64xbf16>
    %cst = arith.constant dense<0.000000e+00> : vector<64x64xf32>
    %7 = tpu.matmul %4, %6, %cst {dimension_numbers = #tpu.dot_dimension_numbers<[0], [0], [1], [1], [0, 1, 1, 1], [], []>} : vector<256x64xbf16>, vector<256x64xbf16>, vector<64x64xf32> -> vector<64x64xf32>
    %c0_6 = arith.constant 0 : index
    %c0_7 = arith.constant 0 : index
    %8 = vector.load %arg8[%c0_6, %c0_7] : memref<1x64xf32, #tpu.memory_space<vmem>>, vector<1x64xf32>
    %cst_8 = arith.constant dense<0xFF800000> : vector<64xf32>
    %9 = vector.multi_reduction <maximumf>, %7, %cst_8 [0] : vector<64x64xf32> to vector<64xf32>
    %10 = vector.shape_cast %9 : vector<64xf32> to vector<1x64xf32>
    %11 = arith.maximumf %8, %10 : vector<1x64xf32>
    %12 = arith.subf %8, %11 : vector<1x64xf32>
    %13 = math.exp %12 : vector<1x64xf32>
    %14 = vector.broadcast %11 : vector<1x64xf32> to vector<64x64xf32>
    %15 = arith.subf %7, %14 : vector<64x64xf32>
    %16 = math.exp %15 : vector<64x64xf32>
    %c0_9 = arith.constant 0 : index
    %c0_10 = arith.constant 0 : index
    %c0_11 = arith.constant 0 : index
    %17 = vector.load %arg5[%c0_9, %c0_10, %c0_11] : memref<1x2x64xf32, #tpu.memory_space<vmem>>, vector<1x2x64xf32>
    %18 = vector.shape_cast %17 : vector<1x2x64xf32> to vector<2x64xf32>
    %cst_12 = arith.constant dense<0.000000e+00> : vector<2x64xf32>
    %19 = tpu.matmul %18, %16, %cst_12 {dimension_numbers = #tpu.dot_dimension_numbers<[1], [0], [0], [1], [0, 0, 1, 1], [], []>} : vector<2x64xf32>, vector<64x64xf32>, vector<2x64xf32> -> vector<2x64xf32>
    %c0_13 = arith.constant 0 : index
    %c0_14 = arith.constant 0 : index
    %20 = vector.load %arg7[%c0_13, %c0_14] : memref<2x64xf32, #tpu.memory_space<vmem>>, vector<2x64xf32>
    %21 = vector.broadcast %13 : vector<1x64xf32> to vector<2x64xf32>
    %22 = arith.mulf %21, %20 : vector<2x64xf32>
    %23 = arith.addf %22, %19 : vector<2x64xf32>
    %c0_15 = arith.constant 0 : index
    %c0_16 = arith.constant 0 : index
    %24 = vector.load %arg7[%c0_15, %c0_16] : memref<2x64xf32, #tpu.memory_space<vmem>>, vector<2x64xf32>
    tpu.vector_store %arg7[%c0_15, %c0_16], %23 {strides = array<i32>} : memref<2x64xf32, #tpu.memory_space<vmem>>, vector<2x64xf32>,
    %c0_17 = arith.constant 0 : index
    %c0_18 = arith.constant 0 : index
    %25 = vector.load %arg8[%c0_17, %c0_18] : memref<1x64xf32, #tpu.memory_space<vmem>>, vector<1x64xf32>
    tpu.vector_store %arg8[%c0_17, %c0_18], %11 {strides = array<i32>} : memref<1x64xf32, #tpu.memory_space<vmem>>, vector<1x64xf32>,
    %c0_i32_19 = arith.constant 0 : i32
    %26 = arith.cmpi eq, %arg2, %c0_i32_19 : i32
    %27 = arith.extui %26 : i1 to i32
    %c0_i32_20 = arith.constant 0 : i32
    %28 = arith.cmpi ne, %27, %c0_i32_20 : i32
    scf.if %28 {
      %c0_21 = arith.constant 0 : index
      %c0_22 = arith.constant 0 : index
      %29 = vector.load %arg7[%c0_21, %c0_22] : memref<2x64xf32, #tpu.memory_space<vmem>>, vector<2x64xf32>
      %30 = vector.extract_strided_slice %29 {offsets = [1, 0], sizes = [1, 64], strides = [1, 1]} : vector<2x64xf32> to vector<1x64xf32>
      %31 = tpu.reciprocal %30 {approx = true} : vector<1x64xf32> -> vector<1x64xf32>
      %32 = vector.extract_strided_slice %29 {offsets = [0, 0], sizes = [1, 64], strides = [1, 1]} : vector<2x64xf32> to vector<1x64xf32>
      %33 = arith.mulf %32, %31 : vector<1x64xf32>
      %c0_23 = arith.constant 0 : index
      %c0_24 = arith.constant 0 : index
      %34 = vector.load %arg8[%c0_23, %c0_24] : memref<1x64xf32, #tpu.memory_space<vmem>>, vector<1x64xf32>
      %cst_25 = arith.constant 5.000000e-03 : f32
      %35 = vector.broadcast %cst_25 : f32 to vector<1x64xf32>
      %36 = arith.mulf %34, %35 : vector<1x64xf32>
      %37 = tpu.concatenate %33, %36 in 0 : vector<1x64xf32>, vector<1x64xf32> -> vector<2x64xf32>
      %c0_26 = arith.constant 0 : index
      %c0_27 = arith.constant 0 : index
      %c0_28 = arith.constant 0 : index
      %38 = vector.load %arg6[%c0_26, %c0_27, %c0_28] : memref<1x2x64xf32, #tpu.memory_space<vmem>>, vector<1x2x64xf32>
      %39 = vector.shape_cast %38 : vector<1x2x64xf32> to vector<2x64xf32>
      %40 = vector.shape_cast %37 : vector<2x64xf32> to vector<1x2x64xf32>
      tpu.vector_store %arg6[%c0_26, %c0_27, %c0_28], %40 {strides = array<i32>} : memref<1x2x64xf32, #tpu.memory_space<vmem>>, vector<1x2x64xf32>,
    } else {
    }
    return
  }
  func.func @transform_0(%arg0: i32, %arg1: i32, %arg2: i32) -> (i32, i32, i32) {
    %c0_i32 = arith.constant 0 : i32
    %c0_i32_0 = arith.constant 0 : i32
    return %arg0, %c0_i32, %arg1 : i32, i32, i32
  }
  func.func @transform_1(%arg0: i32, %arg1: i32, %arg2: i32) -> (i32, i32, i32) {
    %c0_i32 = arith.constant 0 : i32
    %c0_i32_0 = arith.constant 0 : i32
    return %arg0, %c0_i32, %arg2 : i32, i32, i32
  }
  func.func @transform_2(%arg0: i32, %arg1: i32, %arg2: i32) -> (i32, i32, i32) {
    %c0_i32 = arith.constant 0 : i32
    %c0_i32_0 = arith.constant 0 : i32
    return %arg0, %c0_i32, %arg2 : i32, i32, i32
  }
  func.func @transform_3(%arg0: i32, %arg1: i32, %arg2: i32) -> (i32, i32, i32) {
    %c0_i32 = arith.constant 0 : i32
    %c0_i32_0 = arith.constant 0 : i32
    return %arg0, %c0_i32, %arg1 : i32, i32, i32
  }
}

</mosaic_0001>

<llo_original>
// kernel: warpnet_forward.1
$region0: #{warpnet_forward.1}
  #allocation0 [shape = 'u32[]', space=smem, size = 0x4, offset = 0x4, fixed_abs, tag = 'smem constant byte address 0x4 - core index']
  #allocation1 [shape = 'u32[72,128]{1,0:T(1,128)}', space=vmem, size = 0x9000, scoped, tag = 'internal scratch']
  #allocation2 [shape = 'f32[2,64]{1,0:T(2,128)}', space=vmem, size = 0x400, scoped, tag = 'scratch operand']
  #allocation3 [shape = 'f32[1,64]{1,0:T(1,128)}', space=vmem, size = 0x200, scoped, tag = 'scratch operand']
  %s0 = inlined_call_operand.vmem [shape: bf16[2,256,64], index: 0, kind: input, shape index: {}]
  %s1 = inlined_call_operand.vmem [shape: bf16[2,256,64], index: 1, kind: input, shape index: {}]
  %s2 = inlined_call_operand.vmem [shape: f32[2,2,64], index: 2, kind: input, shape index: {}]
  %s3 = inlined_call_operand.vmem [shape: f32[2,2,64], index: 3, kind: output, shape index: {}]
  %s4 = sld [smem:[#allocation0]]
  $region53: #{warpnet_forward.1} parent=0
    _
  %s6 = ssub.s32 1, %s4
  %s7 = scalar_select 0, %s6, %s4
  loop: start=0, step=1, limit=4
  $region2: #{warpnet_forward.1} parent=0 // loop_pre_header
    _
  $region3: #{warpnet_forward.1} parent=0 // loop_header
    %s9 = sphi 0, %s13
    %p10 = scmp.ge.s32.totalorder %s9, 4
    %s16 = sphi 0, %s35
    %s17 = sphi 0, %s31
    %s18 = sphi 0, %s27
    %s19 = sphi 0, %s16
    %s20 = sphi 0, %s17
    %s21 = sphi 0, %s18
    %s22 = sphi 0, %s19
    %s23 = sphi 0, %s20
    %s24 = sphi 0, %s21
    %s40 = sphi 0, %s42
    %s43 = sphi 0, %s40
    %s44 = sphi 0, %s43
    %s60 = sphi 0, %s44
    %s68 = sphi 0, %s70
    %s71 = sphi 0, %s68
    %s72 = sphi 0, %s71
    %s88 = sphi 0, %s72
    %s96 = sphi 0, %s98
    %s99 = sphi 0, %s96
    %s100 = sphi 0, %s99
    %s116 = sphi 0, %s100
    %s124 = sphi 0, %s126
    %s127 = sphi 0, %s124
    %s128 = sphi 0, %s127
    %s144 = sphi 0, %s128
  $region4: #{warpnet_forward.1} parent=0 // loop_header_branch
    %12 = sbr.rel (%p10) target = $region8
  $region5: #{warpnet_forward.1} parent=0 // loop_body
    %s14 = ssub.s32 %s9, 1
    %s15 = ssub.s32 %s9, 2
    %s25 = sadd.s32 1, %s18
    %p26 = scmp.ge.s32.totalorder %s25, 1
    %s27 = scalar_select %p26, 0, %s25
    %s28 = sadd.s32 1, %s17
    %s29 = scalar_select %p26, %s28, %s17
    %p30 = scmp.ge.s32.totalorder %s29, 1
    %s31 = scalar_select %p30, 0, %s29
    %s32 = sadd.s32 1, %s16
    %s33 = scalar_select %p30, %s32, %s16
    %p34 = scmp.ge.s32.totalorder %s33, 2
    %s35 = scalar_select %p34, 0, %s33
    %s36 = ssub.s32 %s16, %s35
    %s37 = ssub.s32 %s17, %s31
    %s38 = sor.u32 %s36, %s37
    %p39 = scmp.eq.s32.totalorder %s38, 0
    %s41 = sadd.s32 %s40, 1
    %s42 = scalar_select %p39, %s40, %s41
    %p45 = pneg %p39
    %p46 = scmp.eq.s32.totalorder %s9, 1
    %p47 = por %p45, %p46
    %p48 = scmp.ne.s32.totalorder %s40, %s43
    %p49 = scmp.eq.s32.totalorder %s9, 0
    %p50 = por %p48, %p49
    %p51 = scmp.ne.s32.totalorder %s40, %s43
    %p52 = scmp.eq.s32.totalorder %s14, 1
    %p53 = por %p51, %p52
    %p54 = scmp.ne.s32.totalorder %s43, %s44
    %p55 = scmp.eq.s32.totalorder %s14, 0
    %p56 = por %p54, %p55
    %p57 = scmp.ne.s32.totalorder %s43, %s44
    %p58 = scmp.eq.s32.totalorder %s15, 1
    %p59 = por %p57, %p58
    %p61 = scmp.ne.s32.totalorder %s44, %s60
    %p62 = scmp.eq.s32.totalorder %s15, 0
    %p63 = por %p61, %p62
    %s64 = ssub.s32 %s16, %s35
    %s65 = ssub.s32 %s18, %s27
    %s66 = sor.u32 %s64, %s65
    %p67 = scmp.eq.s32.totalorder %s66, 0
    %s69 = sadd.s32 %s68, 1
    %s70 = scalar_select %p67, %s68, %s69
    %p73 = pneg %p67
    %p74 = scmp.eq.s32.totalorder %s9, 1
    %p75 = por %p73, %p74
    %p76 = scmp.ne.s32.totalorder %s68, %s71
    %p77 = scmp.eq.s32.totalorder %s9, 0
    %p78 = por %p76, %p77
    %p79 = scmp.ne.s32.totalorder %s68, %s71
    %p80 = scmp.eq.s32.totalorder %s14, 1
    %p81 = por %p79, %p80
    %p82 = scmp.ne.s32.totalorder %s71, %s72
    %p83 = scmp.eq.s32.totalorder %s14, 0
    %p84 = por %p82, %p83
    %p85 = scmp.ne.s32.totalorder %s71, %s72
    %p86 = scmp.eq.s32.totalorder %s15, 1
    %p87 = por %p85, %p86
    %p89 = scmp.ne.s32.totalorder %s72, %s88
    %p90 = scmp.eq.s32.totalorder %s15, 0
    %p91 = por %p89, %p90
    %s92 = ssub.s32 %s16, %s35
    %s93 = ssub.s32 %s18, %s27
    %s94 = sor.u32 %s92, %s93
    %p95 = scmp.eq.s32.totalorder %s94, 0
    %s97 = sadd.s32 %s96, 1
    %s98 = scalar_select %p95, %s96, %s97
    %p101 = pneg %p95
    %p102 = scmp.eq.s32.totalorder %s9, 1
    %p103 = por %p101, %p102
    %p104 = scmp.ne.s32.totalorder %s96, %s99
    %p105 = scmp.eq.s32.totalorder %s9, 0
    %p106 = por %p104, %p105
    %p107 = scmp.ne.s32.totalorder %s96, %s99
    %p108 = scmp.eq.s32.totalorder %s14, 1
    %p109 = por %p107, %p108
    %p110 = scmp.ne.s32.totalorder %s99, %s100
    %p111 = scmp.eq.s32.totalorder %s14, 0
    %p112 = por %p110, %p111
    %p113 = scmp.ne.s32.totalorder %s99, %s100
    %p114 = scmp.eq.s32.totalorder %s15, 1
    %p115 = por %p113, %p114
    %p117 = scmp.ne.s32.totalorder %s100, %s116
    %p118 = scmp.eq.s32.totalorder %s15, 0
    %p119 = por %p117, %p118
    %s120 = ssub.s32 %s16, %s35
    %s121 = ssub.s32 %s17, %s31
    %s122 = sor.u32 %s120, %s121
    %p123 = scmp.eq.s32.totalorder %s122, 0
    %s125 = sadd.s32 %s124, 1
    %s126 = scalar_select %p123, %s124, %s125
    %p129 = pneg %p123
    %p130 = scmp.eq.s32.totalorder %s9, 1
    %p131 = por %p129, %p130
    %p132 = scmp.ne.s32.totalorder %s124, %s127
    %p133 = scmp.eq.s32.totalorder %s9, 0
    %p134 = por %p132, %p133
    %p135 = scmp.ne.s32.totalorder %s124, %s127
    %p136 = scmp.eq.s32.totalorder %s14, 1
    %p137 = por %p135, %p136
    %p138 = scmp.ne.s32.totalorder %s127, %s128
    %p139 = scmp.eq.s32.totalorder %s14, 0
    %p140 = por %p138, %p139
    %p141 = scmp.ne.s32.totalorder %s127, %s128
    %p142 = scmp.eq.s32.totalorder %s15, 1
    %p143 = por %p141, %p142
    %p145 = scmp.ne.s32.totalorder %s128, %s144
    %p146 = scmp.eq.s32.totalorder %s15, 0
    %p147 = por %p145, %p146
    %p148 = scmp.le.s32.totalorder 1, %s9
    %p149 = scmp.lt.s32.totalorder %s9, 3
    %p150 = pnand %p148, %p149
    %p151 = pneg %p150
    // Predicated region
    $region9: #{warpnet_forward.1} parent=5 // pred_check
      _
    $region10: #{warpnet_forward.1} parent=5 // pred_check_branch
      %153 = sbr.rel (%p150) target = $region12
    $region11: #{warpnet_forward.1} parent=5 // pred_region
      %s154 = ssub.s32 %s9, 1
    $region12: #{warpnet_forward.1} parent=5 // pred_fallthru
      _
    %p155 = scmp.lt.s32.totalorder %s9, 2
    // Predicated region
    $region13: #{warpnet_forward.1} parent=5 // pred_check
      %p156 = pneg %p155
    $region14: #{warpnet_forward.1} parent=5 // pred_check_branch
      %158 = sbr.rel (%p156) target = $region16
    $region15: #{warpnet_forward.1} parent=5 // pred_region
      // Predicated region
      $region17: #{warpnet_forward.1} parent=15 // pred_check
        %p159 = pneg %p50
      $region18: #{warpnet_forward.1} parent=15 // pred_check_branch
        %161 = sbr.rel (%p159) target = $region20
      $region19: #{warpnet_forward.1} parent=15 // pred_region
        %p162 = scmp.lt.s32.totalorder %s16, 1
        %s163 = scalar_select %p162, %s16, 1
        %p164 = scmp.lt.s32.totalorder %s17, 0
        %s165 = scalar_select %p164, %s17, 0
        %s166 = smul.addr %s163, 32
        %s167 = sadd.s32 %s165, %s166
        %s168 = smul.addr %s167, 4
        %s169 = scalar_lea.vmem %s0, %s168
      $region20: #{warpnet_forward.1} parent=15 // pred_fallthru
        _
      // Predicated region
      $region21: #{warpnet_forward.1} parent=15 // pred_check
        %p170 = pneg %p78
      $region22: #{warpnet_forward.1} parent=15 // pred_check_branch
        %172 = sbr.rel (%p170) target = $region24
      $region23: #{warpnet_forward.1} parent=15 // pred_region
        %p173 = scmp.lt.s32.totalorder %s16, 1
        %s174 = scalar_select %p173, %s16, 1
        %p175 = scmp.lt.s32.totalorder %s18, 0
        %s176 = scalar_select %p175, %s18, 0
        %s177 = smul.addr %s174, 32
        %s178 = sadd.s32 %s176, %s177
        %s179 = smul.addr %s178, 4
        %s180 = scalar_lea.vmem %s1, %s179
      $region24: #{warpnet_forward.1} parent=15 // pred_fallthru
        _
      // Predicated region
      $region25: #{warpnet_forward.1} parent=15 // pred_check
        %p181 = pneg %p106
      $region26: #{warpnet_forward.1} parent=15 // pred_check_branch
        %183 = sbr.rel (%p181) target = $region28
      $region27: #{warpnet_forward.1} parent=15 // pred_region
        %p184 = scmp.lt.s32.totalorder %s16, 1
        %s185 = scalar_select %p184, %s16, 1
        %p186 = scmp.lt.s32.totalorder %s18, 0
        %s187 = scalar_select %p186, %s18, 0
        %s188 = sadd.s32 %s187, %s185
        %s189 = smul.addr %s188, 2
        %s190 = scalar_lea.vmem %s2, %s189
      $region28: #{warpnet_forward.1} parent=15 // pred_fallthru
        _
    $region16: #{warpnet_forward.1} parent=5 // pred_fallthru
      _
    %p191 = scmp.le.s32.totalorder 1, %s9
    %p192 = scmp.lt.s32.totalorder %s9, 3
    %p193 = pnand %p191, %p192
    %p194 = pneg %p193
    // Predicated region
    $region29: #{warpnet_forward.1} parent=5 // pred_check
      _
    $region30: #{warpnet_forward.1} parent=5 // pred_check_branch
      %196 = sbr.rel (%p193) target = $region32
    $region31: #{warpnet_forward.1} parent=5 // pred_region
      %s197 = ssub.s32 %s9, 1
      %p198 = scmp.lt.s32.totalorder %s19, 1
      %s199 = scalar_select %p198, %s19, 1
      %p200 = scmp.lt.s32.totalorder %s20, 0
      %s201 = scalar_select %p200, %s20, 0
      %s202 = smul.addr %s199, 32
      %s203 = sadd.s32 %s201, %s202
      %s204 = smul.addr %s203, 4
      %s205 = scalar_lea.vmem %s0, %s204
      %p206 = pneg %p56
      %p207 = pneg %p53
      %p208 = scmp.lt.s32.totalorder %s19, 1
      %s209 = scalar_select %p208, %s19, 1
      %p210 = scmp.lt.s32.totalorder %s21, 0
      %s211 = scalar_select %p210, %s21, 0
      %s212 = smul.addr %s209, 32
      %s213 = sadd.s32 %s211, %s212
      %s214 = smul.addr %s213, 4
      %s215 = scalar_lea.vmem %s1, %s214
      %p216 = pneg %p84
      %p217 = pneg %p81
      %p218 = scmp.lt.s32.totalorder %s19, 1
      %s219 = scalar_select %p218, %s19, 1
      %p220 = scmp.lt.s32.totalorder %s21, 0
      %s221 = scalar_select %p220, %s21, 0
      %s222 = sadd.s32 %s221, %s219
      %s223 = smul.addr %s222, 2
      %s224 = scalar_lea.vmem %s2, %s223
      %p225 = pneg %p112
      %p226 = pneg %p109
      %p227 = pneg %p140
      %p228 = pneg %p137
      %p229 = scmp.lt.s32.totalorder %s19, 1
      %s230 = scalar_select %p229, %s19, 1
      %p231 = scmp.lt.s32.totalorder %s20, 0
      %s232 = scalar_select %p231, %s20, 0
      %s233 = sadd.s32 %s232, %s230
      %s234 = smul.addr %s233, 2
      %s235 = scalar_lea.vmem %s3, %s234
      %p236 = scmp.lt.s32.totalorder %s19, 1
      %s237 = scalar_select %p236, %s19, 1
      %p238 = scmp.lt.s32.totalorder %s20, 0
      %s239 = scalar_select %p238, %s20, 0
      %s240 = smul.addr %s237, 32
      %s241 = sadd.s32 %s239, %s240
      %s242 = smul.addr %s241, 4
      %s243 = scalar_lea.vmem %s0, %s242
      %p244 = scmp.lt.s32.totalorder %s19, 1
      %s245 = scalar_select %p244, %s19, 1
      %p246 = scmp.lt.s32.totalorder %s21, 0
      %s247 = scalar_select %p246, %s21, 0
      %s248 = smul.addr %s245, 32
      %s249 = sadd.s32 %s247, %s248
      %s250 = smul.addr %s249, 4
      %s251 = scalar_lea.vmem %s1, %s250
      %p252 = scmp.lt.s32.totalorder %s19, 1
      %s253 = scalar_select %p252, %s19, 1
      %p254 = scmp.lt.s32.totalorder %s21, 0
      %s255 = scalar_select %p254, %s21, 0
      %s256 = sadd.s32 %s255, %s253
      %s257 = smul.addr %s256, 2
      %s258 = scalar_lea.vmem %s2, %s257
      %p259 = scmp.lt.s32.totalorder %s19, 1
      %s260 = scalar_select %p259, %s19, 1
      %p261 = scmp.lt.s32.totalorder %s20, 0
      %s262 = scalar_select %p261, %s20, 0
      %s263 = sadd.s32 %s262, %s260
      %s264 = smul.addr %s263, 2
      %s265 = scalar_lea.vmem %s3, %s264
      %p266 = scmp.eq.s32.totalorder %s21, 0
      // Predicated region
      $region33: #{warpnet_forward.1} parent=31 // pred_check
        %p267 = pneg %p266
      $region34: #{warpnet_forward.1} parent=31 // pred_check_branch
        %269 = sbr.rel (%p267) target = $region36
      $region35: #{warpnet_forward.1} parent=31 // pred_region
        %vm270 = vcmask 516096
        %271 = vst.msk [vmem:[#allocation3] sm:$0x1] %vm270, -inf
        %vm272 = vcmask 517120
        %273 = vst.msk [vmem:[#allocation2] sm:$0x3] %vm272, 0.0
      $region36: #{warpnet_forward.1} parent=31 // pred_fallthru
        _
      %v274 = vld [vmem:[%s251] sm:$0xf]
      %v275 = vld [vmem:[%s251 + $0x4] sm:$0xf]
      %v276 = vld [vmem:[%s251 + $0x8] sm:$0xf]
      %v277 = vld [vmem:[%s251 + $0xc] sm:$0xf]
      %v278 = vld [vmem:[%s251 + $0x10] sm:$0xf]
      %v279 = vld [vmem:[%s251 + $0x14] sm:$0xf]
      %v280 = vld [vmem:[%s251 + $0x18] sm:$0xf]
      %v281 = vld [vmem:[%s251 + $0x1c] sm:$0xf]
      %v282 = vld [vmem:[%s251 + $0x20] sm:$0xf]
      %v283 = vld [vmem:[%s251 + $0x24] sm:$0xf]
      %v284 = vld [vmem:[%s251 + $0x28] sm:$0xf]
      %v285 = vld [vmem:[%s251 + $0x2c] sm:$0xf]
      %v286 = vld [vmem:[%s251 + $0x30] sm:$0xf]
      %v287 = vld [vmem:[%s251 + $0x34] sm:$0xf]
      %v288 = vld [vmem:[%s251 + $0x38] sm:$0xf]
      %v289 = vld [vmem:[%s251 + $0x3c] sm:$0xf]
      %v290 = vld [vmem:[%s251 + $0x40] sm:$0xf]
      %v291 = vld [vmem:[%s251 + $0x44] sm:$0xf]
      %v292 = vld [vmem:[%s251 + $0x48] sm:$0xf]
      %v293 = vld [vmem:[%s251 + $0x4c] sm:$0xf]
      %v294 = vld [vmem:[%s251 + $0x50] sm:$0xf]
      %v295 = vld [vmem:[%s251 + $0x54] sm:$0xf]
      %v296 = vld [vmem:[%s251 + $0x58] sm:$0xf]
      %v297 = vld [vmem:[%s251 + $0x5c] sm:$0xf]
      %v298 = vld [vmem:[%s251 + $0x60] sm:$0xf]
      %v299 = vld [vmem:[%s251 + $0x64] sm:$0xf]
      %v300 = vld [vmem:[%s251 + $0x68] sm:$0xf]
      %v301 = vld [vmem:[%s251 + $0x6c] sm:$0xf]
      %v302 = vld [vmem:[%s251 + $0x70] sm:$0xf]
      %v303 = vld [vmem:[%s251 + $0x74] sm:$0xf]
      %v304 = vld [vmem:[%s251 + $0x78] sm:$0xf]
      %v305 = vld [vmem:[%s251 + $0x7c] sm:$0xf]
      %v306 = vld [vmem:[%s243] sm:$0xf]
      %v307 = vld [vmem:[%s243 + $0x4] sm:$0xf]
      %v308 = vld [vmem:[%s243 + $0x8] sm:$0xf]
      %v309 = vld [vmem:[%s243 + $0xc] sm:$0xf]
      %v310 = vld [vmem:[%s243 + $0x10] sm:$0xf]
      %v311 = vld [vmem:[%s243 + $0x14] sm:$0xf]
      %v312 = vld [vmem:[%s243 + $0x18] sm:$0xf]
      %v313 = vld [vmem:[%s243 + $0x1c] sm:$0xf]
      %v314 = vld [vmem:[%s243 + $0x20] sm:$0xf]
      %v315 = vld [vmem:[%s243 + $0x24] sm:$0xf]
      %v316 = vld [vmem:[%s243 + $0x28] sm:$0xf]
      %v317 = vld [vmem:[%s243 + $0x2c] sm:$0xf]
      %v318 = vld [vmem:[%s243 + $0x30] sm:$0xf]
      %v319 = vld [vmem:[%s243 + $0x34] sm:$0xf]
      %v320 = vld [vmem:[%s243 + $0x38] sm:$0xf]
      %v321 = vld [vmem:[%s243 + $0x3c] sm:$0xf]
      %v322 = vld [vmem:[%s243 + $0x40] sm:$0xf]
      %v323 = vld [vmem:[%s243 + $0x44] sm:$0xf]
      %v324 = vld [vmem:[%s243 + $0x48] sm:$0xf]
      %v325 = vld [vmem:[%s243 + $0x4c] sm:$0xf]
      %v326 = vld [vmem:[%s243 + $0x50] sm:$0xf]
      %v327 = vld [vmem:[%s243 + $0x54] sm:$0xf]
      %v328 = vld [vmem:[%s243 + $0x58] sm:$0xf]
      %v329 = vld [vmem:[%s243 + $0x5c] sm:$0xf]
      %v330 = vld [vmem:[%s243 + $0x60] sm:$0xf]
      %v331 = vld [vmem:[%s243 + $0x64] sm:$0xf]
      %v332 = vld [vmem:[%s243 + $0x68] sm:$0xf]
      %v333 = vld [vmem:[%s243 + $0x6c] sm:$0xf]
      %v334 = vld [vmem:[%s243 + $0x70] sm:$0xf]
      %v335 = vld [vmem:[%s243 + $0x74] sm:$0xf]
      %v336 = vld [vmem:[%s243 + $0x78] sm:$0xf]
      %v337 = vld [vmem:[%s243 + $0x7c] sm:$0xf]
      %v370 = vunpack.c.l.b16 %v274
      %v371 = vunpack.c.l.b16 %v275
      %v372 = vunpack.c.l.b16 %v276
      %v373 = vunpack.c.l.b16 %v277
      %v374 = vunpack.c.l.b16 %v278
      %v375 = vunpack.c.l.b16 %v279
      %v376 = vunpack.c.l.b16 %v280
      %v377 = vunpack.c.l.b16 %v281
      %v378 = vunpack.c.l.b16 %v282
      %v379 = vunpack.c.l.b16 %v283
      %v380 = vunpack.c.l.b16 %v284
      %v381 = vunpack.c.l.b16 %v285
      %v382 = vunpack.c.l.b16 %v286
      %v383 = vunpack.c.l.b16 %v287
      %v384 = vunpack.c.l.b16 %v288
      %v385 = vunpack.c.l.b16 %v289
      %v386 = vunpack.c.l.b16 %v290
      %v387 = vunpack.c.l.b16 %v291
      %v388 = vunpack.c.l.b16 %v292
      %v389 = vunpack.c.l.b16 %v293
      %v390 = vunpack.c.l.b16 %v294
      %v391 = vunpack.c.l.b16 %v295
      %v392 = vunpack.c.l.b16 %v296
      %v393 = vunpack.c.l.b16 %v297
      %v394 = vunpack.c.l.b16 %v298
      %v395 = vunpack.c.l.b16 %v299
      %v396 = vunpack.c.l.b16 %v300
      %v397 = vunpack.c.l.b16 %v301
      %v398 = vunpack.c.l.b16 %v302
      %v399 = vunpack.c.l.b16 %v303
      %v400 = vunpack.c.l.b16 %v304
      %v401 = vunpack.c.l.b16 %v305
      %v402 = vpack.c.b16 %v371, %v370
      %v403 = vpack.c.b16 %v373, %v372
      %v404 = vpack.c.b16 %v375, %v374
      %v405 = vpack.c.b16 %v377, %v376
      %v406 = vpack.c.b16 %v379, %v378
      %v407 = vpack.c.b16 %v381, %v380
      %v408 = vpack.c.b16 %v383, %v382
      %v409 = vpack.c.b16 %v385, %v384
      %v410 = vpack.c.b16 %v387, %v386
      %v411 = vpack.c.b16 %v389, %v388
      %v412 = vpack.c.b16 %v391, %v390
      %v413 = vpack.c.b16 %v393, %v392
      %v414 = vpack.c.b16 %v395, %v394
      %v415 = vpack.c.b16 %v397, %v396
      %v416 = vpack.c.b16 %v399, %v398
      %v417 = vpack.c.b16 %v401, %v400
      %434 = vxpose.xlu0.c.b16.start [1/8] %v402, 128
      %435 = vxpose.xlu0.c.b16.cont [2/8] %v403, 128
      %436 = vxpose.xlu0.c.b16.cont [3/8] %v404, 128
      %437 = vxpose.xlu0.c.b16.cont [4/8] %v405, 128
      %438 = vxpose.xlu0.c.b16.cont [5/8] %v406, 128
      %439 = vxpose.xlu0.c.b16.cont [6/8] %v407, 128
      %440 = vxpose.xlu0.c.b16.cont [7/8] %v408, 128
      %441 = vxpose.xlu0.c.b16.end [8/8] %v409, 128
      %v442 = vpop.trf.xlu0
      %v443 = vpop.trf.xlu0
      %v444 = vpop.trf.xlu0
      %v445 = vpop.trf.xlu0
      %v446 = vpop.trf.xlu0
      %v447 = vpop.trf.xlu0
      %v448 = vpop.trf.xlu0
      %v449 = vpop.trf.xlu0
      %450 = vxpose.xlu0.c.b16.start [1/8] %v410, 128
      %451 = vxpose.xlu0.c.b16.cont [2/8] %v411, 128
      %452 = vxpose.xlu0.c.b16.cont [3/8] %v412, 128
      %453 = vxpose.xlu0.c.b16.cont [4/8] %v413, 128
      %454 = vxpose.xlu0.c.b16.cont [5/8] %v414, 128
      %455 = vxpose.xlu0.c.b16.cont [6/8] %v415, 128
      %456 = vxpose.xlu0.c.b16.cont [7/8] %v416, 128
      %457 = vxpose.xlu0.c.b16.end [8/8] %v417, 128
      %v458 = vpop.trf.xlu0
      %v459 = vpop.trf.xlu0
      %v460 = vpop.trf.xlu0
      %v461 = vpop.trf.xlu0
      %v462 = vpop.trf.xlu0
      %v463 = vpop.trf.xlu0
      %v464 = vpop.trf.xlu0
      %v465 = vpop.trf.xlu0
      %v498 = vunpack.c.l.b16 %v306
      %v499 = vunpack.c.l.b16 %v307
      %v500 = vunpack.c.l.b16 %v308
      %v501 = vunpack.c.l.b16 %v309
      %v502 = vunpack.c.l.b16 %v310
      %v503 = vunpack.c.l.b16 %v311
      %v504 = vunpack.c.l.b16 %v312
      %v505 = vunpack.c.l.b16 %v313
      %v506 = vunpack.c.l.b16 %v314
      %v507 = vunpack.c.l.b16 %v315
      %v508 = vunpack.c.l.b16 %v316
      %v509 = vunpack.c.l.b16 %v317
      %v510 = vunpack.c.l.b16 %v318
      %v511 = vunpack.c.l.b16 %v319
      %v512 = vunpack.c.l.b16 %v320
      %v513 = vunpack.c.l.b16 %v321
      %v514 = vunpack.c.l.b16 %v322
      %v515 = vunpack.c.l.b16 %v323
      %v516 = vunpack.c.l.b16 %v324
      %v517 = vunpack.c.l.b16 %v325
      %v518 = vunpack.c.l.b16 %v326
      %v519 = vunpack.c.l.b16 %v327
      %v520 = vunpack.c.l.b16 %v328
      %v521 = vunpack.c.l.b16 %v329
      %v522 = vunpack.c.l.b16 %v330
      %v523 = vunpack.c.l.b16 %v331
      %v524 = vunpack.c.l.b16 %v332
      %v525 = vunpack.c.l.b16 %v333
      %v526 = vunpack.c.l.b16 %v334
      %v527 = vunpack.c.l.b16 %v335
      %v528 = vunpack.c.l.b16 %v336
      %v529 = vunpack.c.l.b16 %v337
      %v530 = vpack.c.b16 %v499, %v498
      %v531 = vpack.c.b16 %v501, %v500
      %v532 = vpack.c.b16 %v503, %v502
      %v533 = vpack.c.b16 %v505, %v504
      %v534 = vpack.c.b16 %v507, %v506
      %v535 = vpack.c.b16 %v509, %v508
      %v536 = vpack.c.b16 %v511, %v510
      %v537 = vpack.c.b16 %v513, %v512
      %v538 = vpack.c.b16 %v515, %v514
      %v539 = vpack.c.b16 %v517, %v516
      %v540 = vpack.c.b16 %v519, %v518
      %v541 = vpack.c.b16 %v521, %v520
      %v542 = vpack.c.b16 %v523, %v522
      %v543 = vpack.c.b16 %v525, %v524
      %v544 = vpack.c.b16 %v527, %v526
      %v545 = vpack.c.b16 %v529, %v528
      %562 = vmatpush.bf16.msra.mxu0 %v537
      %563 = vmatpush.bf16.msra.mxu0 %v536
      %564 = vmatpush.bf16.msra.mxu0 %v535
      %565 = vmatpush.bf16.msra.mxu0 %v534
      %566 = vmatpush.bf16.msra.mxu0 %v533
      %567 = vmatpush.bf16.msra.mxu0 %v532
      %568 = vmatpush.bf16.msra.mxu0 %v531
      %569 = vmatpush.bf16.msra.mxu0 %v530
      %570 = vmatmul.bf16.gmra.mxu0 %v442
      %v571 = vpop.f32.mrf.mxu0
      %v572 = vadd.f32 0.0, %v571
      %v573 = vpop.f32.mrf.mxu0
      %v574 = vadd.f32 0.0, %v573
      %575 = vmatmul.bf16.gmra.mxu0 %v443
      %v576 = vpop.f32.mrf.mxu0
      %v577 = vadd.f32 0.0, %v576
      %v578 = vpop.f32.mrf.mxu0
      %v579 = vadd.f32 0.0, %v578
      %580 = vmatmul.bf16.gmra.mxu0 %v444
      %v581 = vpop.f32.mrf.mxu0
      %v582 = vadd.f32 0.0, %v581
      %v583 = vpop.f32.mrf.mxu0
      %v584 = vadd.f32 0.0, %v583
      %585 = vmatmul.bf16.gmra.mxu0 %v445
      %v586 = vpop.f32.mrf.mxu0
      %v587 = vadd.f32 0.0, %v586
      %v588 = vpop.f32.mrf.mxu0
      %v589 = vadd.f32 0.0, %v588
      %590 = vdwg.mxu0
      %591 = vmatpush.bf16.msra.mxu0 %v545
      %592 = vmatpush.bf16.msra.mxu0 %v544
      %593 = vmatpush.bf16.msra.mxu0 %v543
      %594 = vmatpush.bf16.msra.mxu0 %v542
      %595 = vmatpush.bf16.msra.mxu0 %v541
      %596 = vmatpush.bf16.msra.mxu0 %v540
      %597 = vmatpush.bf16.msra.mxu0 %v539
      %598 = vmatpush.bf16.msra.mxu0 %v538
      %599 = vmatmul.bf16.gmra.mxu0 %v458
      %v600 = vpop.f32.mrf.mxu0
      %v601 = vadd.f32 %v572, %v600
      %v602 = vpop.f32.mrf.mxu0
      %v603 = vadd.f32 %v574, %v602
      %604 = vmatmul.bf16.gmra.mxu0 %v459
      %v605 = vpop.f32.mrf.mxu0
      %v606 = vadd.f32 %v577, %v605
      %v607 = vpop.f32.mrf.mxu0
      %v608 = vadd.f32 %v579, %v607
      %609 = vmatmul.bf16.gmra.mxu0 %v460
      %v610 = vpop.f32.mrf.mxu0
      %v611 = vadd.f32 %v582, %v610
      %v612 = vpop.f32.mrf.mxu0
      %v613 = vadd.f32 %v584, %v612
      %614 = vmatmul.bf16.gmra.mxu0 %v461
      %v615 = vpop.f32.mrf.mxu0
      %v616 = vadd.f32 %v587, %v615
      %v617 = vpop.f32.mrf.mxu0
      %v618 = vadd.f32 %v589, %v617
      %619 = vdwg.mxu0
      %v620 = vld [vmem:[#allocation3] sm:$0x1]
      %vm621 = vcmask 523264
      %v622 = vsel %vm621, %v601, -inf
      %v623 = vsel %vm621, %v603, -inf
      %v624 = vsel %vm621, %v606, -inf
      %v625 = vsel %vm621, %v608, -inf
      %v626 = vsel %vm621, %v611, -inf
      %v627 = vmax.f32 %v622, %v626
      %v628 = vsel %vm621, %v613, -inf
      %v629 = vmax.f32 %v623, %v628
      %v630 = vsel %vm621, %v616, -inf
      %v631 = vmax.f32 %v624, %v630
      %v632 = vsel %vm621, %v618, -inf
      %v633 = vmax.f32 %v625, %v632
      %v634 = vmax.f32 %v627, %v629
      %v635 = vmax.f32 %v631, %v633
      %v636 = vmax.f32 %v634, %v635
      %v637 = vrot.slane %v636, 4
      %v638 = vmax.f32 %v636, %v637
      %v639 = vrot.slane %v638, 2
      %v640 = vmax.f32 %v638, %v639
      %v641 = vrot.slane %v640, 1
      %v642 = vmax.f32 %v640, %v641
      %v643 = vmax.f32 %v620, %v642
      %v644 = vsub.f32 %v620, %v643
      %v645 = vmul.f32 %v644, 1.442695
      %v646 = vpow.pop %v645
      %v648 = vperm.slane %v643, 0
      %v650 = vsub.f32 %v601, %v648
      %v651 = vsub.f32 %v603, %v648
      %v652 = vsub.f32 %v606, %v648
      %v653 = vsub.f32 %v608, %v648
      %v654 = vsub.f32 %v611, %v648
      %v655 = vsub.f32 %v613, %v648
      %v656 = vsub.f32 %v616, %v648
      %v657 = vsub.f32 %v618, %v648
      %v658 = vmul.f32 %v650, 1.442695
      %v659 = vpow.pop %v658
      %v660 = vmul.f32 %v651, 1.442695
      %v661 = vpow.pop %v660
      %v662 = vmul.f32 %v652, 1.442695
      %v663 = vpow.pop %v662
      %v664 = vmul.f32 %v653, 1.442695
      %v665 = vpow.pop %v664
      %v666 = vmul.f32 %v654, 1.442695
      %v667 = vpow.pop %v666
      %v668 = vmul.f32 %v655, 1.442695
      %v669 = vpow.pop %v668
      %v670 = vmul.f32 %v656, 1.442695
      %v671 = vpow.pop %v670
      %v672 = vmul.f32 %v657, 1.442695
      %v673 = vpow.pop %v672
      %v674 = vld [vmem:[%s258] sm:$0x3]
      %v676 = vsel %vm621, %v674, 0
      %678 = vmatpush.msra.mxu0 0.0
      %679 = vmatpush.msra.mxu0 0.0
      %680 = vmatpush.msra.mxu0 0.0
      %681 = vmatpush.msra.mxu0 0.0
      %682 = vmatpush.msra.mxu0 0.0
      %683 = vmatpush.msra.mxu0 0.0
      %684 = vmatpush.msra.mxu0 0.0
      %685 = vmatpush.msra.mxu0 0.0
      %686 = vmatpush.msra.mxu0 %v673
      %687 = vmatpush.msra.mxu0 %v671
      %688 = vmatpush.msra.mxu0 %v669
      %689 = vmatpush.msra.mxu0 %v667
      %690 = vmatpush.msra.mxu0 %v665
      %691 = vmatpush.msra.mxu0 %v663
      %692 = vmatpush.msra.mxu0 %v661
      %693 = vmatpush.msra.mxu0 %v659
      %694 = vmatmul.f32.gmra.mxu0 %v676
      %v695 = vpop.f32.mrf.mxu0
      %v696 = vadd.f32 0.0, %v695
      %697 = vdwg.mxu0
      %v698 = vld [vmem:[#allocation2] sm:$0x3]
      %v700 = vperm.slane %v646, 0
      %v702 = vmul.f32 %v700, %v698
      %v703 = vadd.f32 %v702, %v696
      %vm704 = vcmask 517120
      %705 = vst.msk [vmem:[#allocation2] sm:$0x3] %vm704, %v703
      %vm706 = vcmask 516096
      %707 = vst.msk [vmem:[#allocation3] sm:$0x1] %vm706, %v643
      // Predicated region
      $region37: #{warpnet_forward.1} parent=31 // pred_check
        %p708 = pneg %p266
      $region38: #{warpnet_forward.1} parent=31 // pred_check_branch
        %710 = sbr.rel (%p708) target = $region40
      $region39: #{warpnet_forward.1} parent=31 // pred_region
        %v711 = vld [vmem:[#allocation2] sm:$0x3]
        %v712 = vrcp.pop %v711
        %v714 = vrot.slane %v712, 1
        %v716 = vmul.f32 %v711, %v714
        %v717 = vld [vmem:[#allocation3] sm:$0x1]
        %v718 = vmul.f32 %v717, 0.005
        %v720 = vperm.slane %v718, 0
        %vm722 = vcmask 1040384
        %v723 = vsel %vm722, %v716, %v720
        %724 = vst.msk [vmem:[%s265] sm:$0x3] %vm704, %v723
      $region40: #{warpnet_forward.1} parent=31 // pred_fallthru
        _
      %p725 = scmp.lt.s32.totalorder %s19, 1
      %s726 = scalar_select %p725, %s19, 1
      %p727 = scmp.lt.s32.totalorder %s20, 0
      %s728 = scalar_select %p727, %s20, 0
      %s729 = sadd.s32 %s728, %s726
      %s730 = smul.addr %s729, 2
      %s731 = scalar_lea.vmem %s3, %s730
      // Predicated region
      $region41: #{warpnet_forward.1} parent=31 // pred_check
        %p732 = pneg %p137
      $region42: #{warpnet_forward.1} parent=31 // pred_check_branch
        %734 = sbr.rel (%p732) target = $region44
      $region43: #{warpnet_forward.1} parent=31 // pred_region
        _
      $region44: #{warpnet_forward.1} parent=31 // pred_fallthru
        _
    $region32: #{warpnet_forward.1} parent=5 // pred_fallthru
      _
    %p735 = scmp.le.s32.totalorder 2, %s9
    // Predicated region
    $region45: #{warpnet_forward.1} parent=5 // pred_check
      %p736 = pneg %p735
    $region46: #{warpnet_forward.1} parent=5 // pred_check_branch
      %738 = sbr.rel (%p736) target = $region48
    $region47: #{warpnet_forward.1} parent=5 // pred_region
      %s739 = ssub.s32 %s9, 2
      // Predicated region
      $region49: #{warpnet_forward.1} parent=47 // pred_check
        %p740 = pneg %p143
      $region50: #{warpnet_forward.1} parent=47 // pred_check_branch
        %742 = sbr.rel (%p740) target = $region52
      $region51: #{warpnet_forward.1} parent=47 // pred_region
        %p743 = scmp.lt.s32.totalorder %s22, 1
        %s744 = scalar_select %p743, %s22, 1
        %p745 = scmp.lt.s32.totalorder %s23, 0
        %s746 = scalar_select %p745, %s23, 0
        %s747 = sadd.s32 %s746, %s744
        %s748 = smul.addr %s747, 2
        %s749 = scalar_lea.vmem %s3, %s748
      $region52: #{warpnet_forward.1} parent=47 // pred_fallthru
        _
    $region48: #{warpnet_forward.1} parent=5 // pred_fallthru
      _
  $region6: #{warpnet_forward.1} parent=0 // loop_footer
    %s13 = sadd.s32 1, %s9
  $region7: #{warpnet_forward.1} parent=0 // loop_footer_branch
    %8 = sbr.rel target = $region3
  $region8: #{warpnet_forward.1} parent=0 // loop_exit
    _

</llo_original>
